<compile_context>
chip_gen: v5e
topology: v5e:2x2
jax: 0.10.0
libtpu: 0.0.40
codegen_flags: <defaults>
</compile_context>

<pallas_src>
import functools

import jax
import jax.numpy as jnp
from jax import lax
from jax.experimental import pallas as pl
from jax.experimental.pallas import tpu as pltpu


def _tpu_info():
    """(vmem_cap_bytes, has_bf16_eup) from the device kind string (conservative)."""
    kind = ""
    try:
        kind = jax.devices()[0].device_kind.lower()
    except Exception:
        pass
    if "v7" in kind or "7x" in kind:
        return 48 << 20, True      # 64 MiB physical per TC -> leave Mosaic headroom
    if "v6" in kind:
        return 100 << 20, True     # 128 MiB physical
    if any(s in kind for s in ("v5", "v4", "v3", "v2")):
        return 100 << 20, False    # v5e and older: no bf16 VPU/EUP -> f32 sigmoid
    return 48 << 20, True          # unknown chip: assume the tightest budget


def _sigmoid_probs(logits_f32, bf16_sigmoid):
    if bf16_sigmoid:
        # bf16 sigmoid on the EUP (v6e/v7x); accumulate/store in f32.
        return jax.nn.sigmoid(logits_f32.astype(jnp.bfloat16)).astype(jnp.float32)
    return jax.nn.sigmoid(logits_f32)


def _decoder_kernel_resident(z_ref, adj_ref, *, tm, tn, inv_b, bf16_sigmoid):
    """z fully resident in VMEM; grid = (row tile i, col tile j)."""
    i = pl.program_id(0)
    j = pl.program_id(1)
    r0 = pl.multiple_of(i * tm, 128)
    c0 = pl.multiple_of(j * tn, 128)
    zr = z_ref[:, pl.ds(r0, tm), :]          # (B, tm, D)
    zc = z_ref[:, pl.ds(c0, tn), :]          # (B, tn, D)
    # Batched contraction over D — feeds the MXU directly, no transpose.
    logits = lax.dot_general(
        zr, zc,
        dimension_numbers=(((2,), (2,)), ((0,), (0,))),
        preferred_element_type=jnp.float32)  # (B, tm, tn) f32
    probs = _sigmoid_probs(logits, bf16_sigmoid)
    adj_ref[0] = jnp.sum(probs, axis=0) * inv_b


def _decoder_kernel_tiled(zr_ref, zc_ref, adj_ref, *, inv_b, bf16_sigmoid, n_k):
    """z streamed as row/col blocks; grid = (i, j[, batch chunk k])."""
    logits = lax.dot_general(
        zr_ref[...], zc_ref[...],
        dimension_numbers=(((2,), (2,)), ((0,), (0,))),
        preferred_element_type=jnp.float32)  # (bt, tm, tn) f32
    probs = _sigmoid_probs(logits, bf16_sigmoid)
    part = jnp.sum(probs, axis=0)

    if n_k == 1:
        # Whole batch in one step: single store, fold 1/B into it.
        adj_ref[0] = part * inv_b
    else:
        # Rare fallback (huge B): resident output tile across the batch axis.
        k = pl.program_id(2)

        @pl.when(k == 0)
        def _():
            adj_ref[...] = jnp.zeros_like(adj_ref)

        adj_ref[0] += part

        @pl.when(k == n_k - 1)
        def _():
            adj_ref[...] = adj_ref[...] * inv_b


def _pick_tile(n_pad, target):
    """Largest multiple of 128 dividing n_pad and <= target (n_pad % 128 == 0)."""
    t = min(target, n_pad)
    t = max((t // 128) * 128, 128)
    while t > 128 and n_pad % t != 0:
        t -= 128
    return t


def graph_decoder_adj(z, *, tile_n=1024, compute_dtype=jnp.bfloat16):
    """Pallas kernel: mean_b sigmoid(z_b @ z_b^T). Returns (1, N, N) f32."""
    B, N, D = z.shape
    vmem_cap, bf16_eup = _tpu_info()
    exact = jnp.dtype(compute_dtype) == jnp.dtype(jnp.float32)
    bf16_sigmoid = (not exact) and bf16_eup

    # Pre-cast z in the wrapper (halves DMA bytes, removes per-step VPU cast).
    zc = z.astype(compute_dtype)
    in_item = jnp.dtype(compute_dtype).itemsize
    out_item = 4
    headroom = 4 << 20

    # Pad N to a multiple of 128: lane-dense stores, 128-aligned tiles.
    n_pad = ((N + 127) // 128) * 128
    if n_pad != N:
        zc = jnp.pad(zc, ((0, 0), (0, n_pad - N), (0, 0)))

    z_bytes = B * n_pad * D * in_item
    # Keep z fully resident in VMEM when it is small: z is DMA'd once and only
    # the N x N output streams through HBM.
    z_resident = 2 * z_bytes <= min(16 << 20, vmem_cap // 4)

    def in_bytes(bt_, t_):   # two double-buffered z blocks
        return 2 * 2 * bt_ * t_ * D * in_item

    def out_bytes(t_):       # double-buffered output tile
        return 2 * t_ * t_ * out_item

    tile = _pick_tile(n_pad, tile_n)
    if z_resident:
        while tile > 128 and 2 * z_bytes + out_bytes(tile) + headroom > vmem_cap:
            tile = _pick_tile(n_pad, tile - 128)
        bt = B
        est = 2 * z_bytes + out_bytes(tile) + headroom
    else:
        while tile > 128 and in_bytes(B, tile) + out_bytes(tile) + headroom > vmem_cap:
            tile = _pick_tile(n_pad, tile - 128)
        # Largest divisor of B whose row/col blocks still fit the budget (bt | B).
        bt = 1
        for d in range(B, 0, -1):
            if B % d == 0 and in_bytes(d, tile) + out_bytes(tile) + headroom <= vmem_cap:
                bt = d
                break
        est = in_bytes(bt, tile) + out_bytes(tile) + headroom

    tm = tn = tile
    vmem_limit = int(min(max(est, 16 << 20), vmem_cap))
    inv_b = 1.0 / B

    if z_resident:
        grid = (n_pad // tm, n_pad // tn)
        kernel = functools.partial(_decoder_kernel_resident, tm=tm, tn=tn,
                                   inv_b=inv_b, bf16_sigmoid=bf16_sigmoid)
        in_specs = [pl.BlockSpec((B, n_pad, D), lambda i, j: (0, 0, 0))]
        out_specs = pl.BlockSpec((1, tm, tn), lambda i, j: (0, i, j))
        dim_sem = ("parallel", "parallel")
        operands = (zc,)
    elif bt == B:
        grid = (n_pad // tm, n_pad // tn)
        kernel = functools.partial(_decoder_kernel_tiled, inv_b=inv_b,
                                   bf16_sigmoid=bf16_sigmoid, n_k=1)
        in_specs = [pl.BlockSpec((B, tm, D), lambda i, j: (0, i, 0)),
                    pl.BlockSpec((B, tn, D), lambda i, j: (0, j, 0))]
        out_specs = pl.BlockSpec((1, tm, tn), lambda i, j: (0, i, j))
        dim_sem = ("parallel", "parallel")
        operands = (zc, zc)
    else:
        n_k = B // bt
        grid = (n_pad // tm, n_pad // tn, n_k)
        kernel = functools.partial(_decoder_kernel_tiled, inv_b=inv_b,
                                   bf16_sigmoid=bf16_sigmoid, n_k=n_k)
        in_specs = [pl.BlockSpec((bt, tm, D), lambda i, j, k: (k, i, 0)),
                    pl.BlockSpec((bt, tn, D), lambda i, j, k: (k, j, 0))]
        out_specs = pl.BlockSpec((1, tm, tn), lambda i, j, k: (0, i, j))
        dim_sem = ("parallel", "parallel", "arbitrary")
        operands = (zc, zc)

    adj = pl.pallas_call(
        kernel,
        out_shape=jax.ShapeDtypeStruct((1, n_pad, n_pad), jnp.float32),
        grid_spec=pltpu.PrefetchScalarGridSpec(
            num_scalar_prefetch=0,
            grid=grid,
            in_specs=in_specs,
            out_specs=out_specs,
        ),
        compiler_params=pltpu.CompilerParams(
            # i/j are independent output tiles -> shardable across v7x TensorCores.
            dimension_semantics=dim_sem,
            vmem_limit_bytes=vmem_limit,
        ),
    )(*operands)

    if n_pad != N:
        adj = adj[:, :N, :N]
    return adj


def graph_decoder_forward(z, rk_lgt, dropout=0.0, gdc="ip", training=False,
                          compute_dtype=jnp.bfloat16):
    """Full forward matching GraphDecoder.forward (eval mode, gdc='ip')."""
    assert gdc == "ip", "only gdc='ip' implemented"
    assert rk_lgt.shape[1] == z.shape[2], "zdim not compatible!"
    # F.dropout with training=False is the identity.
    rk = jnp.power(jax.nn.sigmoid(rk_lgt), 0.5)                   # (1, zdim)
    adj = graph_decoder_adj(z, compute_dtype=compute_dtype)       # (1, N, N)
    return adj, z, jnp.power(rk, 2)


def _reference(z, rk_lgt):
    rk = jnp.power(jax.nn.sigmoid(rk_lgt), 0.5)
    adj_lgt = jnp.einsum("bnd,bmd->bnm", z, z)
    adj = jax.nn.sigmoid(adj_lgt)
    adj = jnp.mean(adj, axis=0, keepdims=True)
    return adj, z, jnp.power(rk, 2)


if __name__ == "__main__":
    key = jax.random.PRNGKey(0)
    kz, kp = jax.random.split(key)

    B, N, ZDIM = 2, 16, 32
    z = jax.random.normal(kz, (B, N, ZDIM), dtype=jnp.float32)
    # torch.nn.init.uniform_(rk_lgt, a=-6.0, b=0.0)
    rk_lgt = jax.random.uniform(kp, (1, ZDIM), minval=-6.0, maxval=0.0,
                                dtype=jnp.float32)

    adj_ref, z_ref, rk2_ref = _reference(z, rk_lgt)

    # Exact path: f32 MXU inputs + f32 sigmoid — tight tolerance.
    adj32, z_out, rk2 = graph_decoder_forward(z, rk_lgt, compute_dtype=jnp.float32)
    adj32 = jax.block_until_ready(adj32)
    z_out = jax.block_until_ready(z_out)
    rk2 = jax.block_until_ready(rk2)
    assert adj32.shape == (1, N, N)
    assert jnp.allclose(adj32, adj_ref, atol=1e-5, rtol=1e-5)

    # Fast path: bf16 MXU inputs (+ bf16 sigmoid on v6e/v7x), f32 accumulation.
    adj_fast, _, _ = graph_decoder_forward(z, rk_lgt, compute_dtype=jnp.bfloat16)
    adj_fast = jax.block_until_ready(adj_fast)
    assert adj_fast.shape == (1, N, N)
    assert jnp.allclose(adj_fast, adj_ref, atol=2e-2, rtol=2e-2)

    assert jnp.allclose(z_out, z_ref)
    assert jnp.allclose(rk2, rk2_ref, atol=1e-6)

    print("KERNEL_OK")
</pallas_src>

<mosaic_0001>
module attributes {stable_mosaic.version = 11 : i64} {
  func.func @_decoder_kernel_resident(%arg0: i32, %arg1: i32, %arg2: memref<2x128x32xf32, #tpu.memory_space<vmem>>, %arg3: memref<1x128x128xf32, #tpu.memory_space<vmem>>) attributes {dimension_semantics = [#tpu.dimension_semantics<parallel>, #tpu.dimension_semantics<parallel>], iteration_bounds = array<i64: 1, 1>, scalar_prefetch = 0 : i64, scratch_operands = 0 : i64, tpu.core_type = #tpu.core_type<tc>, window_params = [{pipeline_mode = #tpu.pipeline_mode<synchronous>, transform_indices = @transform_0, window_bounds = array<i64: 2, 128, 32>}, {transform_indices = @transform_1, window_bounds = array<i64: 1, 128, 128>}]} {
    %c128_i32 = arith.constant 128 : i32
    %0 = arith.muli %arg0, %c128_i32 : i32
    %1 = tpu.assume_multiple %0, 128 : i32
    %c128_i32_0 = arith.constant 128 : i32
    %2 = arith.muli %arg1, %c128_i32_0 : i32
    %3 = tpu.assume_multiple %2, 128 : i32
    %c0 = arith.constant 0 : index
    %4 = arith.index_cast %1 : i32 to index
    %c0_1 = arith.constant 0 : index
    %5 = vector.load %arg2[%c0, %4, %c0_1] : memref<2x128x32xf32, #tpu.memory_space<vmem>>, vector<2x128x32xf32>
    %c0_2 = arith.constant 0 : index
    %6 = arith.index_cast %3 : i32 to index
    %c0_3 = arith.constant 0 : index
    %7 = vector.load %arg2[%c0_2, %6, %c0_3] : memref<2x128x32xf32, #tpu.memory_space<vmem>>, vector<2x128x32xf32>
    %cst = arith.constant dense<0.000000e+00> : vector<2x128x128xf32>
    %8 = tpu.matmul %5, %7, %cst {dimension_numbers = #tpu.dot_dimension_numbers<[2], [2], [1], [1], [0, 0, 0, 1, 1, 1], [0], [0]>} : vector<2x128x32xf32>, vector<2x128x32xf32>, vector<2x128x128xf32> -> vector<2x128x128xf32>
    %9 = arith.negf %8 : vector<2x128x128xf32>
    %10 = math.exp %9 : vector<2x128x128xf32>
    %cst_4 = arith.constant 1.000000e+00 : f32
    %11 = vector.broadcast %cst_4 : f32 to vector<2x128x128xf32>
    %12 = arith.addf %11, %10 : vector<2x128x128xf32>
    %13 = arith.divf %11, %12 : vector<2x128x128xf32>
    %cst_5 = arith.constant dense<0.000000e+00> : vector<128x128xf32>
    %14 = vector.multi_reduction <add>, %13, %cst_5 [0] : vector<2x128x128xf32> to vector<128x128xf32>
    %cst_6 = arith.constant 5.000000e-01 : f32
    %15 = vector.broadcast %cst_6 : f32 to vector<128x128xf32>
    %16 = arith.mulf %14, %15 : vector<128x128xf32>
    %c0_7 = arith.constant 0 : index
    %c0_8 = arith.constant 0 : index
    %c0_9 = arith.constant 0 : index
    %17 = vector.load %arg3[%c0_7, %c0_8, %c0_9] : memref<1x128x128xf32, #tpu.memory_space<vmem>>, vector<1x128x128xf32>
    %18 = vector.shape_cast %17 : vector<1x128x128xf32> to vector<128x128xf32>
    %19 = vector.shape_cast %16 : vector<128x128xf32> to vector<1x128x128xf32>
    tpu.vector_store %arg3[%c0_7, %c0_8, %c0_9], %19 {strides = array<i32>} : memref<1x128x128xf32, #tpu.memory_space<vmem>>, vector<1x128x128xf32>,
    return
  }
  func.func @transform_0(%arg0: i32, %arg1: i32) -> (i32, i32, i32) {
    %c0_i32 = arith.constant 0 : i32
    %c0_i32_0 = arith.constant 0 : i32
    %c0_i32_1 = arith.constant 0 : i32
    %c0_i32_2 = arith.constant 0 : i32
    return %c0_i32, %c0_i32_0, %c0_i32_1 : i32, i32, i32
  }
  func.func @transform_1(%arg0: i32, %arg1: i32) -> (i32, i32, i32) {
    %c0_i32 = arith.constant 0 : i32
    %c0_i32_0 = arith.constant 0 : i32
    return %c0_i32, %arg0, %arg1 : i32, i32, i32
  }
}

</mosaic_0001>

<llo_original>
// kernel: tpu_custom_call.1
$region0: #{tpu_custom_call.1}
  #allocation0 [shape = 'u32[]', space=smem, size = 0x4, offset = 0x4, fixed_abs, tag = 'smem constant byte address 0x4 - core index']
  #allocation1 [shape = 'u32[72,128]{1,0:T(1,128)}', space=vmem, size = 0x9000, scoped, tag = 'internal scratch']
  %s0 = inlined_call_operand.vmem [shape: f32[2,128,32], index: 0, kind: input, shape index: {}]
  %s1 = inlined_call_operand.hbm [shape: f32[1,128,128], index: 1, kind: output, shape index: {}]
  %s2 = sld [smem:[#allocation0]]
  $region14: #{tpu_custom_call.1} parent=0
    _
  %s4 = ssub.s32 1, %s2
  %s5 = scalar_select 0, %s4, %s2
  $region1: #{tpu_custom_call.1} parent=0
    #allocation2 [shape = 'u8[65536]{0}', space=vmem, size = 0x10000, scoped, tag = 'output window, operand 0, single buffered']
    #allocation3 [shape = 's32[1]{0}', space=sflag, size = 0x4, scoped, tag = 'scoped memory for tpu_custom_call.1']
    %6 = vsyncpa [#allocation3], 0
    // Predicated region
    $region2: #{tpu_custom_call.1} parent=1 // pred_check
      _
    $region3: #{tpu_custom_call.1} parent=1 // pred_check_branch
      %8 = sbr.rel (0) target = $region5
    $region4: #{tpu_custom_call.1} parent=1 // pred_region
      _
    $region5: #{tpu_custom_call.1} parent=1 // pred_fallthru
      _
    %s9 = smul.u32 0, 128
    %s10 = smul.u32 0, 128
    %s11 = scalar_lea.vmem %s0, %s9
    %v12 = vld [vmem:[%s11] sm:$0xff]
    %v13 = vld [vmem:[%s11 + $0x8] sm:$0xff]
    %v14 = vld [vmem:[%s11 + $0x10] sm:$0xff]
    %v15 = vld [vmem:[%s11 + $0x18] sm:$0xff]
    %v16 = vld [vmem:[%s11 + $0x20] sm:$0xff]
    %v17 = vld [vmem:[%s11 + $0x28] sm:$0xff]
    %v18 = vld [vmem:[%s11 + $0x30] sm:$0xff]
    %v19 = vld [vmem:[%s11 + $0x38] sm:$0xff]
    %v20 = vld [vmem:[%s11 + $0x40] sm:$0xff]
    %v21 = vld [vmem:[%s11 + $0x48] sm:$0xff]
    %v22 = vld [vmem:[%s11 + $0x50] sm:$0xff]
    %v23 = vld [vmem:[%s11 + $0x58] sm:$0xff]
    %v24 = vld [vmem:[%s11 + $0x60] sm:$0xff]
    %v25 = vld [vmem:[%s11 + $0x68] sm:$0xff]
    %v26 = vld [vmem:[%s11 + $0x70] sm:$0xff]
    %v27 = vld [vmem:[%s11 + $0x78] sm:$0xff]
    %v28 = vld [vmem:[%s11 + $0x80] sm:$0xff]
    %v29 = vld [vmem:[%s11 + $0x88] sm:$0xff]
    %v30 = vld [vmem:[%s11 + $0x90] sm:$0xff]
    %v31 = vld [vmem:[%s11 + $0x98] sm:$0xff]
    %v32 = vld [vmem:[%s11 + $0xa0] sm:$0xff]
    %v33 = vld [vmem:[%s11 + $0xa8] sm:$0xff]
    %v34 = vld [vmem:[%s11 + $0xb0] sm:$0xff]
    %v35 = vld [vmem:[%s11 + $0xb8] sm:$0xff]
    %v36 = vld [vmem:[%s11 + $0xc0] sm:$0xff]
    %v37 = vld [vmem:[%s11 + $0xc8] sm:$0xff]
    %v38 = vld [vmem:[%s11 + $0xd0] sm:$0xff]
    %v39 = vld [vmem:[%s11 + $0xd8] sm:$0xff]
    %v40 = vld [vmem:[%s11 + $0xe0] sm:$0xff]
    %v41 = vld [vmem:[%s11 + $0xe8] sm:$0xff]
    %v42 = vld [vmem:[%s11 + $0xf0] sm:$0xff]
    %v43 = vld [vmem:[%s11 + $0xf8] sm:$0xff]
    %s44 = scalar_lea.vmem %s0, %s10
    %v45 = vld [vmem:[%s44] sm:$0xff]
    %v46 = vld [vmem:[%s44 + $0x8] sm:$0xff]
    %v47 = vld [vmem:[%s44 + $0x10] sm:$0xff]
    %v48 = vld [vmem:[%s44 + $0x18] sm:$0xff]
    %v49 = vld [vmem:[%s44 + $0x20] sm:$0xff]
    %v50 = vld [vmem:[%s44 + $0x28] sm:$0xff]
    %v51 = vld [vmem:[%s44 + $0x30] sm:$0xff]
    %v52 = vld [vmem:[%s44 + $0x38] sm:$0xff]
    %v53 = vld [vmem:[%s44 + $0x40] sm:$0xff]
    %v54 = vld [vmem:[%s44 + $0x48] sm:$0xff]
    %v55 = vld [vmem:[%s44 + $0x50] sm:$0xff]
    %v56 = vld [vmem:[%s44 + $0x58] sm:$0xff]
    %v57 = vld [vmem:[%s44 + $0x60] sm:$0xff]
    %v58 = vld [vmem:[%s44 + $0x68] sm:$0xff]
    %v59 = vld [vmem:[%s44 + $0x70] sm:$0xff]
    %v60 = vld [vmem:[%s44 + $0x78] sm:$0xff]
    %v61 = vld [vmem:[%s44 + $0x80] sm:$0xff]
    %v62 = vld [vmem:[%s44 + $0x88] sm:$0xff]
    %v63 = vld [vmem:[%s44 + $0x90] sm:$0xff]
    %v64 = vld [vmem:[%s44 + $0x98] sm:$0xff]
    %v65 = vld [vmem:[%s44 + $0xa0] sm:$0xff]
    %v66 = vld [vmem:[%s44 + $0xa8] sm:$0xff]
    %v67 = vld [vmem:[%s44 + $0xb0] sm:$0xff]
    %v68 = vld [vmem:[%s44 + $0xb8] sm:$0xff]
    %v69 = vld [vmem:[%s44 + $0xc0] sm:$0xff]
    %v70 = vld [vmem:[%s44 + $0xc8] sm:$0xff]
    %v71 = vld [vmem:[%s44 + $0xd0] sm:$0xff]
    %v72 = vld [vmem:[%s44 + $0xd8] sm:$0xff]
    %v73 = vld [vmem:[%s44 + $0xe0] sm:$0xff]
    %v74 = vld [vmem:[%s44 + $0xe8] sm:$0xff]
    %v75 = vld [vmem:[%s44 + $0xf0] sm:$0xff]
    %v76 = vld [vmem:[%s44 + $0xf8] sm:$0xff]
    %vm77 = vcmask 261120
    %v79 = vsel %vm77, %v12, 0
    %v82 = vsel %vm77, %v13, 0
    %v85 = vsel %vm77, %v14, 0
    %v88 = vsel %vm77, %v15, 0
    %v91 = vsel %vm77, %v16, 0
    %v94 = vsel %vm77, %v17, 0
    %v97 = vsel %vm77, %v18, 0
    %v100 = vsel %vm77, %v19, 0
    %v103 = vsel %vm77, %v20, 0
    %v106 = vsel %vm77, %v21, 0
    %v109 = vsel %vm77, %v22, 0
    %v112 = vsel %vm77, %v23, 0
    %v115 = vsel %vm77, %v24, 0
    %v118 = vsel %vm77, %v25, 0
    %v121 = vsel %vm77, %v26, 0
    %v124 = vsel %vm77, %v27, 0
    %v127 = vsel %vm77, %v45, 0
    %v130 = vsel %vm77, %v46, 0
    %v133 = vsel %vm77, %v47, 0
    %v136 = vsel %vm77, %v48, 0
    %v139 = vsel %vm77, %v49, 0
    %v142 = vsel %vm77, %v50, 0
    %v145 = vsel %vm77, %v51, 0
    %v148 = vsel %vm77, %v52, 0
    %v151 = vsel %vm77, %v53, 0
    %v154 = vsel %vm77, %v54, 0
    %v157 = vsel %vm77, %v55, 0
    %v160 = vsel %vm77, %v56, 0
    %v163 = vsel %vm77, %v57, 0
    %v166 = vsel %vm77, %v58, 0
    %v169 = vsel %vm77, %v59, 0
    %v172 = vsel %vm77, %v60, 0
    %174 = vmatpush.xpose.msra.mxu0 %v172
    %175 = vmatpush.xpose.msra.mxu0 %v169
    %176 = vmatpush.xpose.msra.mxu0 %v166
    %177 = vmatpush.xpose.msra.mxu0 %v163
    %178 = vmatpush.xpose.msra.mxu0 %v160
    %179 = vmatpush.xpose.msra.mxu0 %v157
    %180 = vmatpush.xpose.msra.mxu0 %v154
    %181 = vmatpush.xpose.msra.mxu0 %v151
    %182 = vmatpush.xpose.msra.mxu0 %v148
    %183 = vmatpush.xpose.msra.mxu0 %v145
    %184 = vmatpush.xpose.msra.mxu0 %v142
    %185 = vmatpush.xpose.msra.mxu0 %v139
    %186 = vmatpush.xpose.msra.mxu0 %v136
    %187 = vmatpush.xpose.msra.mxu0 %v133
    %188 = vmatpush.xpose.msra.mxu0 %v130
    %189 = vmatpush.xpose.msra.mxu0 %v127
    %190 = vmatmul.f32.gmra.mxu0 %v79
    %v191 = vpop.f32.mrf.mxu0
    %v192 = vadd.f32 0.0, %v191
    %193 = vmatmul.f32.gmra.mxu0 %v82
    %v194 = vpop.f32.mrf.mxu0
    %v195 = vadd.f32 0.0, %v194
    %196 = vmatmul.f32.gmra.mxu0 %v85
    %v197 = vpop.f32.mrf.mxu0
    %v198 = vadd.f32 0.0, %v197
    %199 = vmatmul.f32.gmra.mxu0 %v88
    %v200 = vpop.f32.mrf.mxu0
    %v201 = vadd.f32 0.0, %v200
    %202 = vmatmul.f32.gmra.mxu0 %v91
    %v203 = vpop.f32.mrf.mxu0
    %v204 = vadd.f32 0.0, %v203
    %205 = vmatmul.f32.gmra.mxu0 %v94
    %v206 = vpop.f32.mrf.mxu0
    %v207 = vadd.f32 0.0, %v206
    %208 = vmatmul.f32.gmra.mxu0 %v97
    %v209 = vpop.f32.mrf.mxu0
    %v210 = vadd.f32 0.0, %v209
    %211 = vmatmul.f32.gmra.mxu0 %v100
    %v212 = vpop.f32.mrf.mxu0
    %v213 = vadd.f32 0.0, %v212
    %214 = vmatmul.f32.gmra.mxu0 %v103
    %v215 = vpop.f32.mrf.mxu0
    %v216 = vadd.f32 0.0, %v215
    %217 = vmatmul.f32.gmra.mxu0 %v106
    %v218 = vpop.f32.mrf.mxu0
    %v219 = vadd.f32 0.0, %v218
    %220 = vmatmul.f32.gmra.mxu0 %v109
    %v221 = vpop.f32.mrf.mxu0
    %v222 = vadd.f32 0.0, %v221
    %223 = vmatmul.f32.gmra.mxu0 %v112
    %v224 = vpop.f32.mrf.mxu0
    %v225 = vadd.f32 0.0, %v224
    %226 = vmatmul.f32.gmra.mxu0 %v115
    %v227 = vpop.f32.mrf.mxu0
    %v228 = vadd.f32 0.0, %v227
    %229 = vmatmul.f32.gmra.mxu0 %v118
    %v230 = vpop.f32.mrf.mxu0
    %v231 = vadd.f32 0.0, %v230
    %232 = vmatmul.f32.gmra.mxu0 %v121
    %v233 = vpop.f32.mrf.mxu0
    %v234 = vadd.f32 0.0, %v233
    %235 = vmatmul.f32.gmra.mxu0 %v124
    %v236 = vpop.f32.mrf.mxu0
    %v237 = vadd.f32 0.0, %v236
    %238 = vdwg.mxu0
    %v240 = vsel %vm77, %v28, 0
    %v243 = vsel %vm77, %v29, 0
    %v246 = vsel %vm77, %v30, 0
    %v249 = vsel %vm77, %v31, 0
    %v252 = vsel %vm77, %v32, 0
    %v255 = vsel %vm77, %v33, 0
    %v258 = vsel %vm77, %v34, 0
    %v261 = vsel %vm77, %v35, 0
    %v264 = vsel %vm77, %v36, 0
    %v267 = vsel %vm77, %v37, 0
    %v270 = vsel %vm77, %v38, 0
    %v273 = vsel %vm77, %v39, 0
    %v276 = vsel %vm77, %v40, 0
    %v279 = vsel %vm77, %v41, 0
    %v282 = vsel %vm77, %v42, 0
    %v285 = vsel %vm77, %v43, 0
    %v288 = vsel %vm77, %v61, 0
    %v291 = vsel %vm77, %v62, 0
    %v294 = vsel %vm77, %v63, 0
    %v297 = vsel %vm77, %v64, 0
    %v300 = vsel %vm77, %v65, 0
    %v303 = vsel %vm77, %v66, 0
    %v306 = vsel %vm77, %v67, 0
    %v309 = vsel %vm77, %v68, 0
    %v312 = vsel %vm77, %v69, 0
    %v315 = vsel %vm77, %v70, 0
    %v318 = vsel %vm77, %v71, 0
    %v321 = vsel %vm77, %v72, 0
    %v324 = vsel %vm77, %v73, 0
    %v327 = vsel %vm77, %v74, 0
    %v330 = vsel %vm77, %v75, 0
    %v333 = vsel %vm77, %v76, 0
    %335 = vmatpush.xpose.msra.mxu0 %v333
    %336 = vmatpush.xpose.msra.mxu0 %v330
    %337 = vmatpush.xpose.msra.mxu0 %v327
    %338 = vmatpush.xpose.msra.mxu0 %v324
    %339 = vmatpush.xpose.msra.mxu0 %v321
    %340 = vmatpush.xpose.msra.mxu0 %v318
    %341 = vmatpush.xpose.msra.mxu0 %v315
    %342 = vmatpush.xpose.msra.mxu0 %v312
    %343 = vmatpush.xpose.msra.mxu0 %v309
    %344 = vmatpush.xpose.msra.mxu0 %v306
    %345 = vmatpush.xpose.msra.mxu0 %v303
    %346 = vmatpush.xpose.msra.mxu0 %v300
    %347 = vmatpush.xpose.msra.mxu0 %v297
    %348 = vmatpush.xpose.msra.mxu0 %v294
    %349 = vmatpush.xpose.msra.mxu0 %v291
    %350 = vmatpush.xpose.msra.mxu0 %v288
    %351 = vmatmul.f32.gmra.mxu0 %v240
    %v352 = vpop.f32.mrf.mxu0
    %v353 = vadd.f32 0.0, %v352
    %354 = vmatmul.f32.gmra.mxu0 %v243
    %v355 = vpop.f32.mrf.mxu0
    %v356 = vadd.f32 0.0, %v355
    %357 = vmatmul.f32.gmra.mxu0 %v246
    %v358 = vpop.f32.mrf.mxu0
    %v359 = vadd.f32 0.0, %v358
    %360 = vmatmul.f32.gmra.mxu0 %v249
    %v361 = vpop.f32.mrf.mxu0
    %v362 = vadd.f32 0.0, %v361
    %363 = vmatmul.f32.gmra.mxu0 %v252
    %v364 = vpop.f32.mrf.mxu0
    %v365 = vadd.f32 0.0, %v364
    %366 = vmatmul.f32.gmra.mxu0 %v255
    %v367 = vpop.f32.mrf.mxu0
    %v368 = vadd.f32 0.0, %v367
    %369 = vmatmul.f32.gmra.mxu0 %v258
    %v370 = vpop.f32.mrf.mxu0
    %v371 = vadd.f32 0.0, %v370
    %372 = vmatmul.f32.gmra.mxu0 %v261
    %v373 = vpop.f32.mrf.mxu0
    %v374 = vadd.f32 0.0, %v373
    %375 = vmatmul.f32.gmra.mxu0 %v264
    %v376 = vpop.f32.mrf.mxu0
    %v377 = vadd.f32 0.0, %v376
    %378 = vmatmul.f32.gmra.mxu0 %v267
    %v379 = vpop.f32.mrf.mxu0
    %v380 = vadd.f32 0.0, %v379
    %381 = vmatmul.f32.gmra.mxu0 %v270
    %v382 = vpop.f32.mrf.mxu0
    %v383 = vadd.f32 0.0, %v382
    %384 = vmatmul.f32.gmra.mxu0 %v273
    %v385 = vpop.f32.mrf.mxu0
    %v386 = vadd.f32 0.0, %v385
    %387 = vmatmul.f32.gmra.mxu0 %v276
    %v388 = vpop.f32.mrf.mxu0
    %v389 = vadd.f32 0.0, %v388
    %390 = vmatmul.f32.gmra.mxu0 %v279
    %v391 = vpop.f32.mrf.mxu0
    %v392 = vadd.f32 0.0, %v391
    %393 = vmatmul.f32.gmra.mxu0 %v282
    %v394 = vpop.f32.mrf.mxu0
    %v395 = vadd.f32 0.0, %v394
    %396 = vmatmul.f32.gmra.mxu0 %v285
    %v397 = vpop.f32.mrf.mxu0
    %v398 = vadd.f32 0.0, %v397
    %399 = vdwg.mxu0
    %v400 = vxor.u32 %v192, 2147483648
    %v401 = vxor.u32 %v195, 2147483648
    %v402 = vxor.u32 %v198, 2147483648
    %v403 = vxor.u32 %v201, 2147483648
    %v404 = vxor.u32 %v204, 2147483648
    %v405 = vxor.u32 %v207, 2147483648
    %v406 = vxor.u32 %v210, 2147483648
    %v407 = vxor.u32 %v213, 2147483648
    %v408 = vxor.u32 %v216, 2147483648
    %v409 = vxor.u32 %v219, 2147483648
    %v410 = vxor.u32 %v222, 2147483648
    %v411 = vxor.u32 %v225, 2147483648
    %v412 = vxor.u32 %v228, 2147483648
    %v413 = vxor.u32 %v231, 2147483648
    %v414 = vxor.u32 %v234, 2147483648
    %v415 = vxor.u32 %v237, 2147483648
    %v416 = vxor.u32 %v353, 2147483648
    %v417 = vxor.u32 %v356, 2147483648
    %v418 = vxor.u32 %v359, 2147483648
    %v419 = vxor.u32 %v362, 2147483648
    %v420 = vxor.u32 %v365, 2147483648
    %v421 = vxor.u32 %v368, 2147483648
    %v422 = vxor.u32 %v371, 2147483648
    %v423 = vxor.u32 %v374, 2147483648
    %v424 = vxor.u32 %v377, 2147483648
    %v425 = vxor.u32 %v380, 2147483648
    %v426 = vxor.u32 %v383, 2147483648
    %v427 = vxor.u32 %v386, 2147483648
    %v428 = vxor.u32 %v389, 2147483648
    %v429 = vxor.u32 %v392, 2147483648
    %v430 = vxor.u32 %v395, 2147483648
    %v431 = vxor.u32 %v398, 2147483648
    %v432 = vmul.f32 %v400, 1.442695
    %v433 = vpow.pop %v432
    %v434 = vmul.f32 %v401, 1.442695
    %v435 = vpow.pop %v434
    %v436 = vmul.f32 %v402, 1.442695
    %v437 = vpow.pop %v436
    %v438 = vmul.f32 %v403, 1.442695
    %v439 = vpow.pop %v438
    %v440 = vmul.f32 %v404, 1.442695
    %v441 = vpow.pop %v440
    %v442 = vmul.f32 %v405, 1.442695
    %v443 = vpow.pop %v442
    %v444 = vmul.f32 %v406, 1.442695
    %v445 = vpow.pop %v444
    %v446 = vmul.f32 %v407, 1.442695
    %v447 = vpow.pop %v446
    %v448 = vmul.f32 %v408, 1.442695
    %v449 = vpow.pop %v448
    %v450 = vmul.f32 %v409, 1.442695
    %v451 = vpow.pop %v450
    %v452 = vmul.f32 %v410, 1.442695
    %v453 = vpow.pop %v452
    %v454 = vmul.f32 %v411, 1.442695
    %v455 = vpow.pop %v454
    %v456 = vmul.f32 %v412, 1.442695
    %v457 = vpow.pop %v456
    %v458 = vmul.f32 %v413, 1.442695
    %v459 = vpow.pop %v458
    %v460 = vmul.f32 %v414, 1.442695
    %v461 = vpow.pop %v460
    %v462 = vmul.f32 %v415, 1.442695
    %v463 = vpow.pop %v462
    %v464 = vmul.f32 %v416, 1.442695
    %v465 = vpow.pop %v464
    %v466 = vmul.f32 %v417, 1.442695
    %v467 = vpow.pop %v466
    %v468 = vmul.f32 %v418, 1.442695
    %v469 = vpow.pop %v468
    %v470 = vmul.f32 %v419, 1.442695
    %v471 = vpow.pop %v470
    %v472 = vmul.f32 %v420, 1.442695
    %v473 = vpow.pop %v472
    %v474 = vmul.f32 %v421, 1.442695
    %v475 = vpow.pop %v474
    %v476 = vmul.f32 %v422, 1.442695
    %v477 = vpow.pop %v476
    %v478 = vmul.f32 %v423, 1.442695
    %v479 = vpow.pop %v478
    %v480 = vmul.f32 %v424, 1.442695
    %v481 = vpow.pop %v480
    %v482 = vmul.f32 %v425, 1.442695
    %v483 = vpow.pop %v482
    %v484 = vmul.f32 %v426, 1.442695
    %v485 = vpow.pop %v484
    %v486 = vmul.f32 %v427, 1.442695
    %v487 = vpow.pop %v486
    %v488 = vmul.f32 %v428, 1.442695
    %v489 = vpow.pop %v488
    %v490 = vmul.f32 %v429, 1.442695
    %v491 = vpow.pop %v490
    %v492 = vmul.f32 %v430, 1.442695
    %v493 = vpow.pop %v492
    %v494 = vmul.f32 %v431, 1.442695
    %v495 = vpow.pop %v494
    %v496 = vadd.f32 %v433, 1.0
    %v497 = vadd.f32 %v435, 1.0
    %v498 = vadd.f32 %v437, 1.0
    %v499 = vadd.f32 %v439, 1.0
    %v500 = vadd.f32 %v441, 1.0
    %v501 = vadd.f32 %v443, 1.0
    %v502 = vadd.f32 %v445, 1.0
    %v503 = vadd.f32 %v447, 1.0
    %v504 = vadd.f32 %v449, 1.0
    %v505 = vadd.f32 %v451, 1.0
    %v506 = vadd.f32 %v453, 1.0
    %v507 = vadd.f32 %v455, 1.0
    %v508 = vadd.f32 %v457, 1.0
    %v509 = vadd.f32 %v459, 1.0
    %v510 = vadd.f32 %v461, 1.0
    %v511 = vadd.f32 %v463, 1.0
    %v512 = vadd.f32 %v465, 1.0
    %v513 = vadd.f32 %v467, 1.0
    %v514 = vadd.f32 %v469, 1.0
    %v515 = vadd.f32 %v471, 1.0
    %v516 = vadd.f32 %v473, 1.0
    %v517 = vadd.f32 %v475, 1.0
    %v518 = vadd.f32 %v477, 1.0
    %v519 = vadd.f32 %v479, 1.0
    %v520 = vadd.f32 %v481, 1.0
    %v521 = vadd.f32 %v483, 1.0
    %v522 = vadd.f32 %v485, 1.0
    %v523 = vadd.f32 %v487, 1.0
    %v524 = vadd.f32 %v489, 1.0
    %v525 = vadd.f32 %v491, 1.0
    %v526 = vadd.f32 %v493, 1.0
    %v527 = vadd.f32 %v495, 1.0
    %v528 = vrcp.pop %v496
    %v529 = vmul.f32 %v496, %v528
    %v530 = vsub.f32 1.0, %v529
    %v531 = vmul.f32 %v528, %v530
    %v532 = vadd.f32 %v528, %v531
    %vm533 = vweird.f32 %v496
    %vm534 = vweird.f32 %v528
    %vm535 = vmor %vm533, %vm534
    %v536 = vsel %vm535, %v528, %v532
    %v537 = vand.u32 2147483647, %v496
    %vm538 = vcmp.eq.f32.partialorder %v537, 8.507059e+37
    %v539 = vand.u32 %v496, 2147483648
    %v540 = vor.u32 1.1754944e-38, %v539
    %v541 = vsel %vm538, %v540, %v536
    %v542 = vmul.f32 1.0, %v541
    %v543 = vrcp.pop %v497
    %v544 = vmul.f32 %v497, %v543
    %v545 = vsub.f32 1.0, %v544
    %v546 = vmul.f32 %v543, %v545
    %v547 = vadd.f32 %v543, %v546
    %vm548 = vweird.f32 %v497
    %vm549 = vweird.f32 %v543
    %vm550 = vmor %vm548, %vm549
    %v551 = vsel %vm550, %v543, %v547
    %v552 = vand.u32 2147483647, %v497
    %vm553 = vcmp.eq.f32.partialorder %v552, 8.507059e+37
    %v554 = vand.u32 %v497, 2147483648
    %v555 = vor.u32 1.1754944e-38, %v554
    %v556 = vsel %vm553, %v555, %v551
    %v557 = vmul.f32 1.0, %v556
    %v558 = vrcp.pop %v498
    %v559 = vmul.f32 %v498, %v558
    %v560 = vsub.f32 1.0, %v559
    %v561 = vmul.f32 %v558, %v560
    %v562 = vadd.f32 %v558, %v561
    %vm563 = vweird.f32 %v498
    %vm564 = vweird.f32 %v558
    %vm565 = vmor %vm563, %vm564
    %v566 = vsel %vm565, %v558, %v562
    %v567 = vand.u32 2147483647, %v498
    %vm568 = vcmp.eq.f32.partialorder %v567, 8.507059e+37
    %v569 = vand.u32 %v498, 2147483648
    %v570 = vor.u32 1.1754944e-38, %v569
    %v571 = vsel %vm568, %v570, %v566
    %v572 = vmul.f32 1.0, %v571
    %v573 = vrcp.pop %v499
    %v574 = vmul.f32 %v499, %v573
    %v575 = vsub.f32 1.0, %v574
    %v576 = vmul.f32 %v573, %v575
    %v577 = vadd.f32 %v573, %v576
    %vm578 = vweird.f32 %v499
    %vm579 = vweird.f32 %v573
    %vm580 = vmor %vm578, %vm579
    %v581 = vsel %vm580, %v573, %v577
    %v582 = vand.u32 2147483647, %v499
    %vm583 = vcmp.eq.f32.partialorder %v582, 8.507059e+37
    %v584 = vand.u32 %v499, 2147483648
    %v585 = vor.u32 1.1754944e-38, %v584
    %v586 = vsel %vm583, %v585, %v581
    %v587 = vmul.f32 1.0, %v586
    %v588 = vrcp.pop %v500
    %v589 = vmul.f32 %v500, %v588
    %v590 = vsub.f32 1.0, %v589
    %v591 = vmul.f32 %v588, %v590
    %v592 = vadd.f32 %v588, %v591
    %vm593 = vweird.f32 %v500
    %vm594 = vweird.f32 %v588
    %vm595 = vmor %vm593, %vm594
    %v596 = vsel %vm595, %v588, %v592
    %v597 = vand.u32 2147483647, %v500
    %vm598 = vcmp.eq.f32.partialorder %v597, 8.507059e+37
    %v599 = vand.u32 %v500, 2147483648
    %v600 = vor.u32 1.1754944e-38, %v599
    %v601 = vsel %vm598, %v600, %v596
    %v602 = vmul.f32 1.0, %v601
    %v603 = vrcp.pop %v501
    %v604 = vmul.f32 %v501, %v603
    %v605 = vsub.f32 1.0, %v604
    %v606 = vmul.f32 %v603, %v605
    %v607 = vadd.f32 %v603, %v606
    %vm608 = vweird.f32 %v501
    %vm609 = vweird.f32 %v603
    %vm610 = vmor %vm608, %vm609
    %v611 = vsel %vm610, %v603, %v607
    %v612 = vand.u32 2147483647, %v501
    %vm613 = vcmp.eq.f32.partialorder %v612, 8.507059e+37
    %v614 = vand.u32 %v501, 2147483648
    %v615 = vor.u32 1.1754944e-38, %v614
    %v616 = vsel %vm613, %v615, %v611
    %v617 = vmul.f32 1.0, %v616
    %v618 = vrcp.pop %v502
    %v619 = vmul.f32 %v502, %v618
    %v620 = vsub.f32 1.0, %v619
    %v621 = vmul.f32 %v618, %v620
    %v622 = vadd.f32 %v618, %v621
    %vm623 = vweird.f32 %v502
    %vm624 = vweird.f32 %v618
    %vm625 = vmor %vm623, %vm624
    %v626 = vsel %vm625, %v618, %v622
    %v627 = vand.u32 2147483647, %v502
    %vm628 = vcmp.eq.f32.partialorder %v627, 8.507059e+37
    %v629 = vand.u32 %v502, 2147483648
    %v630 = vor.u32 1.1754944e-38, %v629
    %v631 = vsel %vm628, %v630, %v626
    %v632 = vmul.f32 1.0, %v631
    %v633 = vrcp.pop %v503
    %v634 = vmul.f32 %v503, %v633
    %v635 = vsub.f32 1.0, %v634
    %v636 = vmul.f32 %v633, %v635
    %v637 = vadd.f32 %v633, %v636
    %vm638 = vweird.f32 %v503
    %vm639 = vweird.f32 %v633
    %vm640 = vmor %vm638, %vm639
    %v641 = vsel %vm640, %v633, %v637
    %v642 = vand.u32 2147483647, %v503
    %vm643 = vcmp.eq.f32.partialorder %v642, 8.507059e+37
    %v644 = vand.u32 %v503, 2147483648
    %v645 = vor.u32 1.1754944e-38, %v644
    %v646 = vsel %vm643, %v645, %v641
    %v647 = vmul.f32 1.0, %v646
    %v648 = vrcp.pop %v504
    %v649 = vmul.f32 %v504, %v648
    %v650 = vsub.f32 1.0, %v649
    %v651 = vmul.f32 %v648, %v650
    %v652 = vadd.f32 %v648, %v651
    %vm653 = vweird.f32 %v504
    %vm654 = vweird.f32 %v648
    %vm655 = vmor %vm653, %vm654
    %v656 = vsel %vm655, %v648, %v652
    %v657 = vand.u32 2147483647, %v504
    %vm658 = vcmp.eq.f32.partialorder %v657, 8.507059e+37
    %v659 = vand.u32 %v504, 2147483648
    %v660 = vor.u32 1.1754944e-38, %v659
    %v661 = vsel %vm658, %v660, %v656
    %v662 = vmul.f32 1.0, %v661
    %v663 = vrcp.pop %v505
    %v664 = vmul.f32 %v505, %v663
    %v665 = vsub.f32 1.0, %v664
    %v666 = vmul.f32 %v663, %v665
    %v667 = vadd.f32 %v663, %v666
    %vm668 = vweird.f32 %v505
    %vm669 = vweird.f32 %v663
    %vm670 = vmor %vm668, %vm669
    %v671 = vsel %vm670, %v663, %v667
    %v672 = vand.u32 2147483647, %v505
    %vm673 = vcmp.eq.f32.partialorder %v672, 8.507059e+37
    %v674 = vand.u32 %v505, 2147483648
    %v675 = vor.u32 1.1754944e-38, %v674
    %v676 = vsel %vm673, %v675, %v671
    %v677 = vmul.f32 1.0, %v676
    %v678 = vrcp.pop %v506
    %v679 = vmul.f32 %v506, %v678
    %v680 = vsub.f32 1.0, %v679
    %v681 = vmul.f32 %v678, %v680
    %v682 = vadd.f32 %v678, %v681
    %vm683 = vweird.f32 %v506
    %vm684 = vweird.f32 %v678
    %vm685 = vmor %vm683, %vm684
    %v686 = vsel %vm685, %v678, %v682
    %v687 = vand.u32 2147483647, %v506
    %vm688 = vcmp.eq.f32.partialorder %v687, 8.507059e+37
    %v689 = vand.u32 %v506, 2147483648
    %v690 = vor.u32 1.1754944e-38, %v689
    %v691 = vsel %vm688, %v690, %v686
    %v692 = vmul.f32 1.0, %v691
    %v693 = vrcp.pop %v507
    %v694 = vmul.f32 %v507, %v693
    %v695 = vsub.f32 1.0, %v694
    %v696 = vmul.f32 %v693, %v695
    %v697 = vadd.f32 %v693, %v696
    %vm698 = vweird.f32 %v507
    %vm699 = vweird.f32 %v693
    %vm700 = vmor %vm698, %vm699
    %v701 = vsel %vm700, %v693, %v697
    %v702 = vand.u32 2147483647, %v507
    %vm703 = vcmp.eq.f32.partialorder %v702, 8.507059e+37
    %v704 = vand.u32 %v507, 2147483648
    %v705 = vor.u32 1.1754944e-38, %v704
    %v706 = vsel %vm703, %v705, %v701
    %v707 = vmul.f32 1.0, %v706
    %v708 = vrcp.pop %v508
    %v709 = vmul.f32 %v508, %v708
    %v710 = vsub.f32 1.0, %v709
    %v711 = vmul.f32 %v708, %v710
    %v712 = vadd.f32 %v708, %v711
    %vm713 = vweird.f32 %v508
    %vm714 = vweird.f32 %v708
    %vm715 = vmor %vm713, %vm714
    %v716 = vsel %vm715, %v708, %v712
    %v717 = vand.u32 2147483647, %v508
    %vm718 = vcmp.eq.f32.partialorder %v717, 8.507059e+37
    %v719 = vand.u32 %v508, 2147483648
    %v720 = vor.u32 1.1754944e-38, %v719
    %v721 = vsel %vm718, %v720, %v716
    %v722 = vmul.f32 1.0, %v721
    %v723 = vrcp.pop %v509
    %v724 = vmul.f32 %v509, %v723
    %v725 = vsub.f32 1.0, %v724
    %v726 = vmul.f32 %v723, %v725
    %v727 = vadd.f32 %v723, %v726
    %vm728 = vweird.f32 %v509
    %vm729 = vweird.f32 %v723
    %vm730 = vmor %vm728, %vm729
    %v731 = vsel %vm730, %v723, %v727
    %v732 = vand.u32 2147483647, %v509
    %vm733 = vcmp.eq.f32.partialorder %v732, 8.507059e+37
    %v734 = vand.u32 %v509, 2147483648
    %v735 = vor.u32 1.1754944e-38, %v734
    %v736 = vsel %vm733, %v735, %v731
    %v737 = vmul.f32 1.0, %v736
    %v738 = vrcp.pop %v510
    %v739 = vmul.f32 %v510, %v738
    %v740 = vsub.f32 1.0, %v739
    %v741 = vmul.f32 %v738, %v740
    %v742 = vadd.f32 %v738, %v741
    %vm743 = vweird.f32 %v510
    %vm744 = vweird.f32 %v738
    %vm745 = vmor %vm743, %vm744
    %v746 = vsel %vm745, %v738, %v742
    %v747 = vand.u32 2147483647, %v510
    %vm748 = vcmp.eq.f32.partialorder %v747, 8.507059e+37
    %v749 = vand.u32 %v510, 2147483648
    %v750 = vor.u32 1.1754944e-38, %v749
    %v751 = vsel %vm748, %v750, %v746
    %v752 = vmul.f32 1.0, %v751
    %v753 = vrcp.pop %v511
    %v754 = vmul.f32 %v511, %v753
    %v755 = vsub.f32 1.0, %v754
    %v756 = vmul.f32 %v753, %v755
    %v757 = vadd.f32 %v753, %v756
    %vm758 = vweird.f32 %v511
    %vm759 = vweird.f32 %v753
    %vm760 = vmor %vm758, %vm759
    %v761 = vsel %vm760, %v753, %v757
    %v762 = vand.u32 2147483647, %v511
    %vm763 = vcmp.eq.f32.partialorder %v762, 8.507059e+37
    %v764 = vand.u32 %v511, 2147483648
    %v765 = vor.u32 1.1754944e-38, %v764
    %v766 = vsel %vm763, %v765, %v761
    %v767 = vmul.f32 1.0, %v766
    %v768 = vrcp.pop %v512
    %v769 = vmul.f32 %v512, %v768
    %v770 = vsub.f32 1.0, %v769
    %v771 = vmul.f32 %v768, %v770
    %v772 = vadd.f32 %v768, %v771
    %vm773 = vweird.f32 %v512
    %vm774 = vweird.f32 %v768
    %vm775 = vmor %vm773, %vm774
    %v776 = vsel %vm775, %v768, %v772
    %v777 = vand.u32 2147483647, %v512
    %vm778 = vcmp.eq.f32.partialorder %v777, 8.507059e+37
    %v779 = vand.u32 %v512, 2147483648
    %v780 = vor.u32 1.1754944e-38, %v779
    %v781 = vsel %vm778, %v780, %v776
    %v782 = vmul.f32 1.0, %v781
    %v783 = vrcp.pop %v513
    %v784 = vmul.f32 %v513, %v783
    %v785 = vsub.f32 1.0, %v784
    %v786 = vmul.f32 %v783, %v785
    %v787 = vadd.f32 %v783, %v786
    %vm788 = vweird.f32 %v513
    %vm789 = vweird.f32 %v783
    %vm790 = vmor %vm788, %vm789
    %v791 = vsel %vm790, %v783, %v787
    %v792 = vand.u32 2147483647, %v513
    %vm793 = vcmp.eq.f32.partialorder %v792, 8.507059e+37
    %v794 = vand.u32 %v513, 2147483648
    %v795 = vor.u32 1.1754944e-38, %v794
    %v796 = vsel %vm793, %v795, %v791
    %v797 = vmul.f32 1.0, %v796
    %v798 = vrcp.pop %v514
    %v799 = vmul.f32 %v514, %v798
    %v800 = vsub.f32 1.0, %v799
    %v801 = vmul.f32 %v798, %v800
    %v802 = vadd.f32 %v798, %v801
    %vm803 = vweird.f32 %v514
    %vm804 = vweird.f32 %v798
    %vm805 = vmor %vm803, %vm804
    %v806 = vsel %vm805, %v798, %v802
    %v807 = vand.u32 2147483647, %v514
    %vm808 = vcmp.eq.f32.partialorder %v807, 8.507059e+37
    %v809 = vand.u32 %v514, 2147483648
    %v810 = vor.u32 1.1754944e-38, %v809
    %v811 = vsel %vm808, %v810, %v806
    %v812 = vmul.f32 1.0, %v811
    %v813 = vrcp.pop %v515
    %v814 = vmul.f32 %v515, %v813
    %v815 = vsub.f32 1.0, %v814
    %v816 = vmul.f32 %v813, %v815
    %v817 = vadd.f32 %v813, %v816
    %vm818 = vweird.f32 %v515
    %vm819 = vweird.f32 %v813
    %vm820 = vmor %vm818, %vm819
    %v821 = vsel %vm820, %v813, %v817
    %v822 = vand.u32 2147483647, %v515
    %vm823 = vcmp.eq.f32.partialorder %v822, 8.507059e+37
    %v824 = vand.u32 %v515, 2147483648
    %v825 = vor.u32 1.1754944e-38, %v824
    %v826 = vsel %vm823, %v825, %v821
    %v827 = vmul.f32 1.0, %v826
    %v828 = vrcp.pop %v516
    %v829 = vmul.f32 %v516, %v828
    %v830 = vsub.f32 1.0, %v829
    %v831 = vmul.f32 %v828, %v830
    %v832 = vadd.f32 %v828, %v831
    %vm833 = vweird.f32 %v516
    %vm834 = vweird.f32 %v828
    %vm835 = vmor %vm833, %vm834
    %v836 = vsel %vm835, %v828, %v832
    %v837 = vand.u32 2147483647, %v516
    %vm838 = vcmp.eq.f32.partialorder %v837, 8.507059e+37
    %v839 = vand.u32 %v516, 2147483648
    %v840 = vor.u32 1.1754944e-38, %v839
    %v841 = vsel %vm838, %v840, %v836
    %v842 = vmul.f32 1.0, %v841
    %v843 = vrcp.pop %v517
    %v844 = vmul.f32 %v517, %v843
    %v845 = vsub.f32 1.0, %v844
    %v846 = vmul.f32 %v843, %v845
    %v847 = vadd.f32 %v843, %v846
    %vm848 = vweird.f32 %v517
    %vm849 = vweird.f32 %v843
    %vm850 = vmor %vm848, %vm849
    %v851 = vsel %vm850, %v843, %v847
    %v852 = vand.u32 2147483647, %v517
    %vm853 = vcmp.eq.f32.partialorder %v852, 8.507059e+37
    %v854 = vand.u32 %v517, 2147483648
    %v855 = vor.u32 1.1754944e-38, %v854
    %v856 = vsel %vm853, %v855, %v851
    %v857 = vmul.f32 1.0, %v856
    %v858 = vrcp.pop %v518
    %v859 = vmul.f32 %v518, %v858
    %v860 = vsub.f32 1.0, %v859
    %v861 = vmul.f32 %v858, %v860
    %v862 = vadd.f32 %v858, %v861
    %vm863 = vweird.f32 %v518
    %vm864 = vweird.f32 %v858
    %vm865 = vmor %vm863, %vm864
    %v866 = vsel %vm865, %v858, %v862
    %v867 = vand.u32 2147483647, %v518
    %vm868 = vcmp.eq.f32.partialorder %v867, 8.507059e+37
    %v869 = vand.u32 %v518, 2147483648
    %v870 = vor.u32 1.1754944e-38, %v869
    %v871 = vsel %vm868, %v870, %v866
    %v872 = vmul.f32 1.0, %v871
    %v873 = vrcp.pop %v519
    %v874 = vmul.f32 %v519, %v873
    %v875 = vsub.f32 1.0, %v874
    %v876 = vmul.f32 %v873, %v875
    %v877 = vadd.f32 %v873, %v876
    %vm878 = vweird.f32 %v519
    %vm879 = vweird.f32 %v873
    %vm880 = vmor %vm878, %vm879
    %v881 = vsel %vm880, %v873, %v877
    %v882 = vand.u32 2147483647, %v519
    %vm883 = vcmp.eq.f32.partialorder %v882, 8.507059e+37
    %v884 = vand.u32 %v519, 2147483648
    %v885 = vor.u32 1.1754944e-38, %v884
    %v886 = vsel %vm883, %v885, %v881
    %v887 = vmul.f32 1.0, %v886
    %v888 = vrcp.pop %v520
    %v889 = vmul.f32 %v520, %v888
    %v890 = vsub.f32 1.0, %v889
    %v891 = vmul.f32 %v888, %v890
    %v892 = vadd.f32 %v888, %v891
    %vm893 = vweird.f32 %v520
    %vm894 = vweird.f32 %v888
    %vm895 = vmor %vm893, %vm894
    %v896 = vsel %vm895, %v888, %v892
    %v897 = vand.u32 2147483647, %v520
    %vm898 = vcmp.eq.f32.partialorder %v897, 8.507059e+37
    %v899 = vand.u32 %v520, 2147483648
    %v900 = vor.u32 1.1754944e-38, %v899
    %v901 = vsel %vm898, %v900, %v896
    %v902 = vmul.f32 1.0, %v901
    %v903 = vrcp.pop %v521
    %v904 = vmul.f32 %v521, %v903
    %v905 = vsub.f32 1.0, %v904
    %v906 = vmul.f32 %v903, %v905
    %v907 = vadd.f32 %v903, %v906
    %vm908 = vweird.f32 %v521
    %vm909 = vweird.f32 %v903
    %vm910 = vmor %vm908, %vm909
    %v911 = vsel %vm910, %v903, %v907
    %v912 = vand.u32 2147483647, %v521
    %vm913 = vcmp.eq.f32.partialorder %v912, 8.507059e+37
    %v914 = vand.u32 %v521, 2147483648
    %v915 = vor.u32 1.1754944e-38, %v914
    %v916 = vsel %vm913, %v915, %v911
    %v917 = vmul.f32 1.0, %v916
    %v918 = vrcp.pop %v522
    %v919 = vmul.f32 %v522, %v918
    %v920 = vsub.f32 1.0, %v919
    %v921 = vmul.f32 %v918, %v920
    %v922 = vadd.f32 %v918, %v921
    %vm923 = vweird.f32 %v522
    %vm924 = vweird.f32 %v918
    %vm925 = vmor %vm923, %vm924
    %v926 = vsel %vm925, %v918, %v922
    %v927 = vand.u32 2147483647, %v522
    %vm928 = vcmp.eq.f32.partialorder %v927, 8.507059e+37
    %v929 = vand.u32 %v522, 2147483648
    %v930 = vor.u32 1.1754944e-38, %v929
    %v931 = vsel %vm928, %v930, %v926
    %v932 = vmul.f32 1.0, %v931
    %v933 = vrcp.pop %v523
    %v934 = vmul.f32 %v523, %v933
    %v935 = vsub.f32 1.0, %v934
    %v936 = vmul.f32 %v933, %v935
    %v937 = vadd.f32 %v933, %v936
    %vm938 = vweird.f32 %v523
    %vm939 = vweird.f32 %v933
    %vm940 = vmor %vm938, %vm939
    %v941 = vsel %vm940, %v933, %v937
    %v942 = vand.u32 2147483647, %v523
    %vm943 = vcmp.eq.f32.partialorder %v942, 8.507059e+37
    %v944 = vand.u32 %v523, 2147483648
    %v945 = vor.u32 1.1754944e-38, %v944
    %v946 = vsel %vm943, %v945, %v941
    %v947 = vmul.f32 1.0, %v946
    %v948 = vrcp.pop %v524
    %v949 = vmul.f32 %v524, %v948
    %v950 = vsub.f32 1.0, %v949
    %v951 = vmul.f32 %v948, %v950
    %v952 = vadd.f32 %v948, %v951
    %vm953 = vweird.f32 %v524
    %vm954 = vweird.f32 %v948
    %vm955 = vmor %vm953, %vm954
    %v956 = vsel %vm955, %v948, %v952
    %v957 = vand.u32 2147483647, %v524
    %vm958 = vcmp.eq.f32.partialorder %v957, 8.507059e+37
    %v959 = vand.u32 %v524, 2147483648
    %v960 = vor.u32 1.1754944e-38, %v959
    %v961 = vsel %vm958, %v960, %v956
    %v962 = vmul.f32 1.0, %v961
    %v963 = vrcp.pop %v525
    %v964 = vmul.f32 %v525, %v963
    %v965 = vsub.f32 1.0, %v964
    %v966 = vmul.f32 %v963, %v965
    %v967 = vadd.f32 %v963, %v966
    %vm968 = vweird.f32 %v525
    %vm969 = vweird.f32 %v963
    %vm970 = vmor %vm968, %vm969
    %v971 = vsel %vm970, %v963, %v967
    %v972 = vand.u32 2147483647, %v525
    %vm973 = vcmp.eq.f32.partialorder %v972, 8.507059e+37
    %v974 = vand.u32 %v525, 2147483648
    %v975 = vor.u32 1.1754944e-38, %v974
    %v976 = vsel %vm973, %v975, %v971
    %v977 = vmul.f32 1.0, %v976
    %v978 = vrcp.pop %v526
    %v979 = vmul.f32 %v526, %v978
    %v980 = vsub.f32 1.0, %v979
    %v981 = vmul.f32 %v978, %v980
    %v982 = vadd.f32 %v978, %v981
    %vm983 = vweird.f32 %v526
    %vm984 = vweird.f32 %v978
    %vm985 = vmor %vm983, %vm984
    %v986 = vsel %vm985, %v978, %v982
    %v987 = vand.u32 2147483647, %v526
    %vm988 = vcmp.eq.f32.partialorder %v987, 8.507059e+37
    %v989 = vand.u32 %v526, 2147483648
    %v990 = vor.u32 1.1754944e-38, %v989
    %v991 = vsel %vm988, %v990, %v986
    %v992 = vmul.f32 1.0, %v991
    %v993 = vrcp.pop %v527
    %v994 = vmul.f32 %v527, %v993
    %v995 = vsub.f32 1.0, %v994
    %v996 = vmul.f32 %v993, %v995
    %v997 = vadd.f32 %v993, %v996
    %vm998 = vweird.f32 %v527
    %vm999 = vweird.f32 %v993
    %vm1000 = vmor %vm998, %vm999
    %v1001 = vsel %vm1000, %v993, %v997
    %v1002 = vand.u32 2147483647, %v527
    %vm1003 = vcmp.eq.f32.partialorder %v1002, 8.507059e+37
    %v1004 = vand.u32 %v527, 2147483648
    %v1005 = vor.u32 1.1754944e-38, %v1004
    %v1006 = vsel %vm1003, %v1005, %v1001
    %v1007 = vmul.f32 1.0, %v1006
    %v1008 = vadd.f32 %v542, %v782
    %v1009 = vadd.f32 %v557, %v797
    %v1010 = vadd.f32 %v572, %v812
    %v1011 = vadd.f32 %v587, %v827
    %v1012 = vadd.f32 %v602, %v842
    %v1013 = vadd.f32 %v617, %v857
    %v1014 = vadd.f32 %v632, %v872
    %v1015 = vadd.f32 %v647, %v887
    %v1016 = vadd.f32 %v662, %v902
    %v1017 = vadd.f32 %v677, %v917
    %v1018 = vadd.f32 %v692, %v932
    %v1019 = vadd.f32 %v707, %v947
    %v1020 = vadd.f32 %v722, %v962
    %v1021 = vadd.f32 %v737, %v977
    %v1022 = vadd.f32 %v752, %v992
    %v1023 = vadd.f32 %v767, %v1007
    %v1024 = vmul.f32 %v1008, 0.5
    %v1025 = vmul.f32 %v1009, 0.5
    %v1026 = vmul.f32 %v1010, 0.5
    %v1027 = vmul.f32 %v1011, 0.5
    %v1028 = vmul.f32 %v1012, 0.5
    %v1029 = vmul.f32 %v1013, 0.5
    %v1030 = vmul.f32 %v1014, 0.5
    %v1031 = vmul.f32 %v1015, 0.5
    %v1032 = vmul.f32 %v1016, 0.5
    %v1033 = vmul.f32 %v1017, 0.5
    %v1034 = vmul.f32 %v1018, 0.5
    %v1035 = vmul.f32 %v1019, 0.5
    %v1036 = vmul.f32 %v1020, 0.5
    %v1037 = vmul.f32 %v1021, 0.5
    %v1038 = vmul.f32 %v1022, 0.5
    %v1039 = vmul.f32 %v1023, 0.5
    %1040 = vst [vmem:[#allocation2] sm:$0xff] %v1024
    %1041 = vst [vmem:[#allocation2 + $0x8] sm:$0xff] %v1025
    %1042 = vst [vmem:[#allocation2 + $0x10] sm:$0xff] %v1026
    %1043 = vst [vmem:[#allocation2 + $0x18] sm:$0xff] %v1027
    %1044 = vst [vmem:[#allocation2 + $0x20] sm:$0xff] %v1028
    %1045 = vst [vmem:[#allocation2 + $0x28] sm:$0xff] %v1029
    %1046 = vst [vmem:[#allocation2 + $0x30] sm:$0xff] %v1030
    %1047 = vst [vmem:[#allocation2 + $0x38] sm:$0xff] %v1031
    %1048 = vst [vmem:[#allocation2 + $0x40] sm:$0xff] %v1032
    %1049 = vst [vmem:[#allocation2 + $0x48] sm:$0xff] %v1033
    %1050 = vst [vmem:[#allocation2 + $0x50] sm:$0xff] %v1034
    %1051 = vst [vmem:[#allocation2 + $0x58] sm:$0xff] %v1035
    %1052 = vst [vmem:[#allocation2 + $0x60] sm:$0xff] %v1036
    %1053 = vst [vmem:[#allocation2 + $0x68] sm:$0xff] %v1037
    %1054 = vst [vmem:[#allocation2 + $0x70] sm:$0xff] %v1038
    %1055 = vst [vmem:[#allocation2 + $0x78] sm:$0xff] %v1039
    // Predicated region
    $region6: #{tpu_custom_call.1} parent=1 // pred_check
      _
    $region7: #{tpu_custom_call.1} parent=1 // pred_check_branch
      %1057 = sbr.rel (0) target = $region9
    $region8: #{tpu_custom_call.1} parent=1 // pred_region
      %1059 = vsyncadd [#allocation3], 0
      %s1060 = sshll.u32 [#allocation2], 4
      %s1061 = int_to_ptr.vmem [resolvable:$true] %s1060
      %s1062 = sshll.u32 %s1, 4
      %s1063 = int_to_ptr.hbm [resolvable:$true] %s1062
      %1068 = dma.vmem_to_hbm [thread:$0]  %s1061, 2048, %s1063, [#allocation3], 128, 128, 8
    $region9: #{tpu_custom_call.1} parent=1 // pred_fallthru
      _
    // Predicated region
    $region10: #{tpu_custom_call.1} parent=1 // pred_check
      _
    $region11: #{tpu_custom_call.1} parent=1 // pred_check_branch
      %1070 = sbr.rel (0) target = $region13
    $region12: #{tpu_custom_call.1} parent=1 // pred_region
      %1072 = dma.done [#allocation3], 2048
    $region13: #{tpu_custom_call.1} parent=1 // pred_fallthru
      _
    %1073 = vsyncpa [#allocation3], 1

</llo_original>
